<compile_context>
chip_gen: v7x
topology: tpu7x:2x2x1
jax: 0.10.0
libtpu: 0.0.40
codegen_flags: <defaults>
</compile_context>

<pallas_src>
import jax
import jax.numpy as jnp
import numpy as np
from jax.experimental import pallas as pl
from jax.experimental.pallas import tpu as pltpu


def _make_fusion_kernel(num_layers):
    def kernel(p_ref, *refs):
        # p_ref : SMEM (L,) f32 softmax probabilities
        # refs  : L input tiles (BM, BN), then 1 output tile (BM, BN)
        x_refs = refs[:num_layers]
        o_ref = refs[num_layers]
        acc = p_ref[0] * x_refs[0][...].astype(jnp.float32)
        for l in range(1, num_layers):
            acc = acc + p_ref[l] * x_refs[l][...].astype(jnp.float32)
        o_ref[...] = acc.astype(o_ref.dtype)

    return kernel


def _vmem_capacity_bytes():
    """Per-TensorCore VMEM capacity; conservative (v7x) fallback if the query fails."""
    try:
        return int(pltpu.get_tpu_info().vmem_capacity_bytes)
    except Exception:
        return 64 * 1024 * 1024


def adaptive_layer_fusion(layer_outputs, weights):
    """Pallas equivalent of AdaptiveLayerFusion.forward.

    layer_outputs: list of L arrays with identical shape/dtype
    weights:       (L,) raw fusion weights (softmax over the L layers)
    """
    L = len(layer_outputs)
    orig_shape = layer_outputs[0].shape
    dtype = layer_outputs[0].dtype
    itemsize = jnp.dtype(dtype).itemsize
    N = int(np.prod(orig_shape))

    # softmax over L scalar weights: done once, outside the kernel (negligible).
    probs = jax.nn.softmax(weights.astype(jnp.float32)).reshape(L)

    # ---- copy-free 2D view ------------------------------------------------
    if N % 128 == 0:
        # lane-dense path: (rows, BN) with BN a multiple of 128 -> unmasked stores
        BN = 128
        for cand in (512, 256, 128):
            if N % cand == 0:
                BN = cand
                break
    else:
        # ragged path: keep the original trailing dim as the (full-extent) lane dim.
        # No jnp.pad of the L input slabs and no output slice -> no extra HBM traffic.
        BN = int(orig_shape[-1]) if len(orig_shape) > 1 else N
    rows = N // BN
    xs = [a.reshape(rows, BN) for a in layer_outputs]

    # ---- generation-aware block sizing ------------------------------------
    # sublane granularity: 8 rows for 4-byte, 16 for 2-byte, 32 for 1-byte dtypes
    sub = {4: 8, 2: 16, 1: 32}.get(itemsize, 8)
    cap = _vmem_capacity_bytes()

    # ~50% of VMEM for the 2*(L+1) double-buffered blocks; 4 MiB/block is past
    # the knee of the measured HBM-roofline curve, so cap there.
    block_budget = (cap // 2) // (2 * (L + 1))
    block_budget = min(block_budget, 4 * 1024 * 1024)
    bm_budget = max(sub, (block_budget // (BN * itemsize)) // sub * sub)

    if rows < 2 * sub:
        BM = rows  # single full-extent block (always layout-legal)
    else:
        # Guarantee >= 2 grid steps so "parallel" can shard across both v7x TCs.
        half = -(-rows // 2)
        half = -(-half // sub) * sub
        BM = min(bm_budget, half)

    grid = (pl.cdiv(rows, BM),)  # last block may be partial; elementwise -> safe

    # vmem limit: double-buffered IO + room for f32 elementwise temporaries + headroom,
    # clamped to 75% of this generation's VMEM (<= ~48 MiB on v7x, <= 96 MiB on v5e/v6e).
    block_bytes = BM * BN * itemsize
    f32_block_bytes = BM * BN * 4
    vmem_limit = 2 * (L + 1) * block_bytes + 3 * f32_block_bytes + 8 * 1024 * 1024
    vmem_limit = int(max(32 * 1024 * 1024, min(vmem_limit, (cap * 3) // 4)))

    tile_spec = pl.BlockSpec((BM, BN), lambda i: (i, 0))
    smem_spec = pl.BlockSpec(memory_space=pltpu.MemorySpace.SMEM)

    out = pl.pallas_call(
        _make_fusion_kernel(L),
        out_shape=jax.ShapeDtypeStruct((rows, BN), dtype),
        grid_spec=pltpu.PrefetchScalarGridSpec(
            num_scalar_prefetch=0,
            grid=grid,
            in_specs=[smem_spec] + [tile_spec] * L,
            out_specs=tile_spec,
        ),
        compiler_params=pltpu.CompilerParams(
            dimension_semantics=("parallel",),
            vmem_limit_bytes=vmem_limit,
        ),
    )(probs, *xs)

    return out.reshape(orig_shape)


if __name__ == "__main__":
    layer_num = 4

    # Deterministic parameter init: nn.Parameter(torch.ones(layer_num))
    fusion_weights = jnp.ones((layer_num,), dtype=jnp.float32)

    key = jax.random.PRNGKey(0)
    k1, k2, k3, kw2 = jax.random.split(key, 4)

    # Test 1: typical (B, S, H) layer outputs (lane-dense path, single block).
    B, S, H = 2, 8, 32
    keys = jax.random.split(k1, layer_num)
    layer_outputs = [jax.random.normal(k, (B, S, H), dtype=jnp.float32) for k in keys]

    fused = jax.block_until_ready(adaptive_layer_fusion(layer_outputs, fusion_weights))
    p = jax.nn.softmax(fusion_weights)
    ref = sum(p[l] * layer_outputs[l] for l in range(layer_num))
    np.testing.assert_allclose(np.asarray(fused), np.asarray(ref), rtol=1e-5, atol=1e-5)

    # Test 2: ragged shape (exercises the no-pad ragged path: full-extent lane dim).
    keys2 = jax.random.split(k2, layer_num)
    w2 = jax.random.normal(kw2, (layer_num,), dtype=jnp.float32)
    layer_outputs2 = [jax.random.normal(k, (2, 7, 48), dtype=jnp.float32) for k in keys2]

    fused2 = jax.block_until_ready(adaptive_layer_fusion(layer_outputs2, w2))
    p2 = jax.nn.softmax(w2)
    ref2 = sum(p2[l] * layer_outputs2[l] for l in range(layer_num))
    np.testing.assert_allclose(np.asarray(fused2), np.asarray(ref2), rtol=1e-5, atol=1e-5)

    # Test 3: multi-step grid with a partial final block (forced >=2 grid steps).
    keys3 = jax.random.split(k3, layer_num)
    layer_outputs3 = [jax.random.normal(k, (4, 100, 128), dtype=jnp.float32) for k in keys3]

    fused3 = jax.block_until_ready(adaptive_layer_fusion(layer_outputs3, fusion_weights))
    ref3 = sum(p[l] * layer_outputs3[l] for l in range(layer_num))
    np.testing.assert_allclose(np.asarray(fused3), np.asarray(ref3), rtol=1e-5, atol=1e-5)

    print("KERNEL_OK")
</pallas_src>

<mosaic_0001>
module attributes {stable_mosaic.version = 11 : i64} {
  func.func @kernel(%arg0: i32, %arg1: memref<4xf32, #tpu.memory_space<smem>>, %arg2: memref<1x512xf32, #tpu.memory_space<vmem>>, %arg3: memref<1x512xf32, #tpu.memory_space<vmem>>, %arg4: memref<1x512xf32, #tpu.memory_space<vmem>>, %arg5: memref<1x512xf32, #tpu.memory_space<vmem>>, %arg6: memref<1x512xf32, #tpu.memory_space<vmem>>) attributes {dimension_semantics = [#tpu.dimension_semantics<parallel>], iteration_bounds = array<i64: 1>, scalar_prefetch = 0 : i64, scratch_operands = 0 : i64, tpu.core_type = #tpu.core_type<tc>, window_params = [{transform_indices = @transform_0, window_bounds = array<i64: 4>}, {transform_indices = @transform_1, window_bounds = array<i64: 1, 512>}, {transform_indices = @transform_2, window_bounds = array<i64: 1, 512>}, {transform_indices = @transform_3, window_bounds = array<i64: 1, 512>}, {transform_indices = @transform_4, window_bounds = array<i64: 1, 512>}, {transform_indices = @transform_5, window_bounds = array<i64: 1, 512>}]} {
    %c0 = arith.constant 0 : index
    %0 = memref.load %arg1[%c0] : memref<4xf32, #tpu.memory_space<smem>>
    %c0_0 = arith.constant 0 : index
    %c0_1 = arith.constant 0 : index
    %1 = vector.load %arg2[%c0_0, %c0_1] : memref<1x512xf32, #tpu.memory_space<vmem>>, vector<1x512xf32>
    %2 = vector.broadcast %0 : f32 to vector<1x512xf32>
    %3 = arith.mulf %2, %1 : vector<1x512xf32>
    %c1 = arith.constant 1 : index
    %4 = memref.load %arg1[%c1] : memref<4xf32, #tpu.memory_space<smem>>
    %c0_2 = arith.constant 0 : index
    %c0_3 = arith.constant 0 : index
    %5 = vector.load %arg3[%c0_2, %c0_3] : memref<1x512xf32, #tpu.memory_space<vmem>>, vector<1x512xf32>
    %6 = vector.broadcast %4 : f32 to vector<1x512xf32>
    %7 = arith.mulf %6, %5 : vector<1x512xf32>
    %8 = arith.addf %3, %7 : vector<1x512xf32>
    %c2 = arith.constant 2 : index
    %9 = memref.load %arg1[%c2] : memref<4xf32, #tpu.memory_space<smem>>
    %c0_4 = arith.constant 0 : index
    %c0_5 = arith.constant 0 : index
    %10 = vector.load %arg4[%c0_4, %c0_5] : memref<1x512xf32, #tpu.memory_space<vmem>>, vector<1x512xf32>
    %11 = vector.broadcast %9 : f32 to vector<1x512xf32>
    %12 = arith.mulf %11, %10 : vector<1x512xf32>
    %13 = arith.addf %8, %12 : vector<1x512xf32>
    %c3 = arith.constant 3 : index
    %14 = memref.load %arg1[%c3] : memref<4xf32, #tpu.memory_space<smem>>
    %c0_6 = arith.constant 0 : index
    %c0_7 = arith.constant 0 : index
    %15 = vector.load %arg5[%c0_6, %c0_7] : memref<1x512xf32, #tpu.memory_space<vmem>>, vector<1x512xf32>
    %16 = vector.broadcast %14 : f32 to vector<1x512xf32>
    %17 = arith.mulf %16, %15 : vector<1x512xf32>
    %18 = arith.addf %13, %17 : vector<1x512xf32>
    %c0_8 = arith.constant 0 : index
    %c0_9 = arith.constant 0 : index
    %19 = vector.load %arg6[%c0_8, %c0_9] : memref<1x512xf32, #tpu.memory_space<vmem>>, vector<1x512xf32>
    tpu.vector_store %arg6[%c0_8, %c0_9], %18 {strides = array<i32>} : memref<1x512xf32, #tpu.memory_space<vmem>>, vector<1x512xf32>,
    return
  }
  func.func @transform_0(%arg0: i32) -> i32 {
    %c0_i32 = arith.constant 0 : i32
    %c0_i32_0 = arith.constant 0 : i32
    return %c0_i32 : i32
  }
  func.func @transform_1(%arg0: i32) -> (i32, i32) {
    %c0_i32 = arith.constant 0 : i32
    %c0_i32_0 = arith.constant 0 : i32
    return %arg0, %c0_i32 : i32, i32
  }
  func.func @transform_2(%arg0: i32) -> (i32, i32) {
    %c0_i32 = arith.constant 0 : i32
    %c0_i32_0 = arith.constant 0 : i32
    return %arg0, %c0_i32 : i32, i32
  }
  func.func @transform_3(%arg0: i32) -> (i32, i32) {
    %c0_i32 = arith.constant 0 : i32
    %c0_i32_0 = arith.constant 0 : i32
    return %arg0, %c0_i32 : i32, i32
  }
  func.func @transform_4(%arg0: i32) -> (i32, i32) {
    %c0_i32 = arith.constant 0 : i32
    %c0_i32_0 = arith.constant 0 : i32
    return %arg0, %c0_i32 : i32, i32
  }
  func.func @transform_5(%arg0: i32) -> (i32, i32) {
    %c0_i32 = arith.constant 0 : i32
    %c0_i32_0 = arith.constant 0 : i32
    return %arg0, %c0_i32 : i32, i32
  }
}

</mosaic_0001>

<llo_original>
// kernel: tpu_custom_call.1
$region0: #{tpu_custom_call.1}
  #allocation0 [shape = 'u32[]', space=smem, size = 0x4, offset = 0x4, fixed_abs, tag = 'smem constant byte address 0x4 - core index']
  #allocation1 [shape = 'u32[144,128]{1,0:T(1,128)}', space=vmem, size = 0x12000, scoped, tag = 'internal scratch']
  %s0 = inlined_call_operand.hbm [shape: f32[4], index: 0, kind: input, shape index: {}]
  %s1 = inlined_call_operand.hbm [shape: f32[1,512], index: 1, kind: input, shape index: {}]
  %s2 = inlined_call_operand.vmem [shape: f32[1,512], index: 2, kind: input, shape index: {}]
  %s3 = inlined_call_operand.vmem [shape: f32[1,512], index: 3, kind: input, shape index: {}]
  %s4 = inlined_call_operand.vmem [shape: f32[1,512], index: 4, kind: input, shape index: {}]
  %s5 = inlined_call_operand.hbm [shape: f32[1,512], index: 5, kind: output, shape index: {}]
  %s6 = sld [smem:[#allocation0]]
  $region38: #{tpu_custom_call.1} parent=0
    _
  %s8 = ssub.s32 1, %s6
  %s9 = scalar_select 0, %s8, %s6
  $region1: #{tpu_custom_call.1} parent=0
    #allocation2 [shape = 'u8[512]{0}', space=smem, size = 0x200, scoped, tag = 'input window, operand 0, single buffered']
    #allocation3 [shape = 's32[1]{0}', space=sflag, size = 0x4, scoped, tag = 'scoped memory for tpu_custom_call.1']
    #allocation4 [shape = 's32[1]{0}', space=sflag, size = 0x4, scoped, tag = 'scoped memory for tpu_custom_call.1']
    #allocation5 [shape = 's32[1]{0}', space=sflag, size = 0x4, scoped, tag = 'scoped memory for tpu_custom_call.1']
    #allocation6 [shape = 'u8[2048]{0}', space=vmem, size = 0x800, scoped, tag = 'input window, operand 1, single buffered']
    #allocation7 [shape = 'u8[2048]{0}', space=vmem, size = 0x800, scoped, tag = 'output window, operand 0, single buffered']
    %10 = vsyncpa [#allocation5], 0
    %11 = vsyncpa [#allocation3], 0
    %12 = vsyncpa [#allocation4], 0
    // Predicated region
    $region2: #{tpu_custom_call.1} parent=1 // pred_check
      _
    $region3: #{tpu_custom_call.1} parent=1 // pred_check_branch
      %14 = sbr.rel (0) target = $region5
    $region4: #{tpu_custom_call.1} parent=1 // pred_region
      %s16 = ssub.s32 16, 16
      %17 = vsyncadd [#allocation5], %s16
      %20 = dma.hbm_to_smem %s0, 16, [#allocation2], [#allocation5]
    $region5: #{tpu_custom_call.1} parent=1 // pred_fallthru
      _
    // Predicated region
    $region6: #{tpu_custom_call.1} parent=1 // pred_check
      _
    $region7: #{tpu_custom_call.1} parent=1 // pred_check_branch
      %22 = sbr.rel (0) target = $region9
    $region8: #{tpu_custom_call.1} parent=1 // pred_region
      %s24 = ssub.s32 64, 64
      %25 = vsyncadd [#allocation3], %s24
      %s27 = sshll.u32 [#allocation6], 4
      %s28 = int_to_ptr.vmem [resolvable:$true] %s27
      %30 = dma.hbm_to_vmem [thread:$0]  %s1, 64, %s28, [#allocation3]
    $region9: #{tpu_custom_call.1} parent=1 // pred_fallthru
      _
    // Predicated region
    $region10: #{tpu_custom_call.1} parent=1 // pred_check
      _
    $region11: #{tpu_custom_call.1} parent=1 // pred_check_branch
      %32 = sbr.rel (0) target = $region13
    $region12: #{tpu_custom_call.1} parent=1 // pred_region
      _
    $region13: #{tpu_custom_call.1} parent=1 // pred_fallthru
      _
    // Predicated region
    $region14: #{tpu_custom_call.1} parent=1 // pred_check
      _
    $region15: #{tpu_custom_call.1} parent=1 // pred_check_branch
      %34 = sbr.rel (0) target = $region17
    $region16: #{tpu_custom_call.1} parent=1 // pred_region
      _
    $region17: #{tpu_custom_call.1} parent=1 // pred_fallthru
      _
    // Predicated region
    $region18: #{tpu_custom_call.1} parent=1 // pred_check
      _
    $region19: #{tpu_custom_call.1} parent=1 // pred_check_branch
      %36 = sbr.rel (0) target = $region21
    $region20: #{tpu_custom_call.1} parent=1 // pred_region
      _
    $region21: #{tpu_custom_call.1} parent=1 // pred_fallthru
      _
    // Predicated region
    $region22: #{tpu_custom_call.1} parent=1 // pred_check
      _
    $region23: #{tpu_custom_call.1} parent=1 // pred_check_branch
      %38 = sbr.rel (0) target = $region25
    $region24: #{tpu_custom_call.1} parent=1 // pred_region
      %39 = dma.done [#allocation5], 16
    $region25: #{tpu_custom_call.1} parent=1 // pred_fallthru
      _
    // Predicated region
    $region26: #{tpu_custom_call.1} parent=1 // pred_check
      _
    $region27: #{tpu_custom_call.1} parent=1 // pred_check_branch
      %41 = sbr.rel (0) target = $region29
    $region28: #{tpu_custom_call.1} parent=1 // pred_region
      %42 = dma.done [#allocation3], 64
    $region29: #{tpu_custom_call.1} parent=1 // pred_fallthru
      _
    %43 = sfence
    %s44 = sld [smem:[#allocation2]]
    %v45 = vld [vmem:[#allocation6] sm:$0xf]
    %v46 = vstv %s44
    %v47 = vmul.f32 %v46, %v45
    %s48 = sld [smem:[#allocation2 + $0x1]]
    %v49 = vld [vmem:[%s2] sm:$0xf]
    %v50 = vstv %s48
    %v51 = vmul.f32 %v50, %v49
    %v52 = vadd.f32 %v47, %v51
    %s53 = sld [smem:[#allocation2 + $0x2]]
    %v54 = vld [vmem:[%s3] sm:$0xf]
    %v55 = vstv %s53
    %v56 = vmul.f32 %v55, %v54
    %v57 = vadd.f32 %v52, %v56
    %s58 = sld [smem:[#allocation2 + $0x3]]
    %v59 = vld [vmem:[%s4] sm:$0xf]
    %v60 = vstv %s58
    %v61 = vmul.f32 %v60, %v59
    %v62 = vadd.f32 %v57, %v61
    %v63 = vlaneseq
    %vm64 = vcmp.ge.s32.totalorder %v63, 0
    %vm65 = vcmp.lt.s32.totalorder %v63, 512
    %vm66 = vmand %vm64, %vm65
    %67 = vst.msk [vmem:[#allocation7] sm:$0xf] %vm66, %v62
    // Predicated region
    $region30: #{tpu_custom_call.1} parent=1 // pred_check
      _
    $region31: #{tpu_custom_call.1} parent=1 // pred_check_branch
      %69 = sbr.rel (0) target = $region33
    $region32: #{tpu_custom_call.1} parent=1 // pred_region
      %s71 = ssub.s32 64, 64
      %72 = vsyncadd [#allocation4], %s71
      %s74 = sshll.u32 [#allocation7], 4
      %s75 = int_to_ptr.vmem [resolvable:$true] %s74
      %77 = dma.vmem_to_hbm [thread:$0]  %s75, 64, %s5, [#allocation4]
    $region33: #{tpu_custom_call.1} parent=1 // pred_fallthru
      _
    // Predicated region
    $region34: #{tpu_custom_call.1} parent=1 // pred_check
      _
    $region35: #{tpu_custom_call.1} parent=1 // pred_check_branch
      %79 = sbr.rel (0) target = $region37
    $region36: #{tpu_custom_call.1} parent=1 // pred_region
      %80 = dma.done [#allocation4], 64
    $region37: #{tpu_custom_call.1} parent=1 // pred_fallthru
      _
    %81 = vsyncpa [#allocation3], 1
    %82 = vsyncpa [#allocation4], 1
    %83 = vsyncpa [#allocation5], 1

</llo_original>
